<compile_context>
chip_gen: v7x
topology: tpu7x:2x2x1
jax: 0.10.0
libtpu: 0.0.40
codegen_flags: <defaults>
</compile_context>

<pallas_src>
import functools

import numpy as np
import jax
import jax.numpy as jnp
from jax.experimental import pallas as pl
from jax.experimental.pallas import tpu as pltpu


def _upfir_rowpoly_kernel(x_ref, o_ref, *, row_taps, col_taps, tile_b, n_rows, out_w):
    """Row-polyphase separable FIR upsample.

    x_ref : (TB, n_rows + halo, Wp)   W-zero-upsampled + padded input block
    o_ref : (TB, n_rows, factor, out_w)  row-phase-planar output block
    row_taps[py] : static tuple of (row_offset_in_padded_input, weight)
    col_taps     : static tuple of (col_offset, weight)
    """
    for ti in range(tile_b):                       # static unroll over batched images
        x = x_ref[ti].astype(jnp.float32)          # (n_rows + halo, Wp)
        for py, taps in enumerate(row_taps):
            # vertical (row) pass: only the taps that hit real input rows
            v = None
            for roff, wy in taps:
                term = wy * x[roff:roff + n_rows, :]
                v = term if v is None else v + term
            # horizontal pass: full FIR over the zero-upsampled width
            acc = None
            for kx, wx in col_taps:
                term = wx * v[:, kx:kx + out_w]
                acc = term if acc is None else acc + term
            o_ref[ti, :, py, :] = acc.astype(o_ref.dtype)


def upsample_kernel_forward(x, kernel_1d=(1, 3, 3, 1), factor=2):
    """Equivalent of UpsampleKernel(kernel_1d, factor).forward(x); x: (N, C, H, W)."""
    k = np.asarray(kernel_1d, dtype=np.float32)
    assert k.ndim == 1, "separable 1-D FIR kernels only (the module's default usage)"
    K = int(k.shape[0])
    f = int(factor)
    p = K - f
    pad0 = (p + 1) // 2 + f - 1
    pad1 = p // 2
    assert pad0 >= 0 and pad1 >= 0  # pure-upsample configs (standard [1,3,3,1], factor=2)

    # make_kernel(k) * factor**2 == outer(k1, k1) with k1 = k * f / sum(k);
    # flip for true convolution (matches torch.flip + F.conv2d in upfirdn2d).
    k1 = (k * f / k.sum())[::-1].copy()

    N, C, H, W = x.shape
    B = N * C
    out_w = f * W
    Wp = f * W + pad0 + pad1

    # --- row-polyphase taps (general in factor / kernel length) -------------
    phases = []
    all_dy = []
    for py in range(f):
        taps = []
        for ky in range(K):
            if (py + ky - pad0) % f == 0:
                dy = (py + ky - pad0) // f           # exact (numerator divisible by f)
                taps.append((dy, float(k1[ky])))
                all_dy.append(dy)
        phases.append(taps)
    pad_top = max(0, -min(all_dy))
    pad_bot = max(0, max(all_dy))
    row_taps = tuple(tuple((dy + pad_top, w) for dy, w in taps) for taps in phases)
    col_taps = tuple((kx, float(k1[kx])) for kx in range(K))
    n_rows_in = H + pad_top + pad_bot

    # --- tile-size / grid selection -----------------------------------------
    def _rup(a, m):
        return (a + m - 1) // m * m

    # VMEM footprint per image with (8,128) tiling padding, double-buffered blocks.
    in_img_vmem = _rup(n_rows_in, 8) * _rup(Wp, 128) * 4
    out_img_vmem = H * _rup(f, 8) * _rup(out_w, 128) * 4
    vmem_budget = 8 * 1024 * 1024                    # stays well under default scoped VMEM
    tb_vmem = max(1, vmem_budget // (2 * (in_img_vmem + out_img_vmem)))
    tb_target = -(-B // 8)                           # aim for ~8 grid steps (megacore/pipeline)
    TB = int(max(1, min(B, tb_vmem, tb_target, 64)))
    n_blocks = (B + TB - 1) // TB
    Bp = n_blocks * TB

    # --- wrapper glue: W zero-insertion upsample + padding (fused XLA ops) ---
    xb = x.reshape(B, H, W)
    xu = jnp.pad(xb[..., None], ((0, 0), (0, 0), (0, 0), (0, f - 1))).reshape(B, H, out_w)
    xpad = jnp.pad(xu, ((0, Bp - B), (pad_top, pad_bot), (pad0, pad1)))

    body = functools.partial(
        _upfir_rowpoly_kernel,
        row_taps=row_taps,
        col_taps=col_taps,
        tile_b=TB,
        n_rows=H,
        out_w=out_w,
    )

    out = pl.pallas_call(
        body,
        out_shape=jax.ShapeDtypeStruct((Bp, H, f, out_w), x.dtype),
        grid=(n_blocks,),
        in_specs=[pl.BlockSpec((TB, n_rows_in, Wp), lambda b: (b, 0, 0))],
        out_specs=pl.BlockSpec((TB, H, f, out_w), lambda b: (b, 0, 0, 0)),
        compiler_params=pltpu.CompilerParams(dimension_semantics=("parallel",)),
    )(xpad)

    # (Bp, H, f, f*W) -> (B, f*H, f*W) is a contiguity-preserving (free) reshape:
    # flat index ((b*H + i)*f + py)*fW + ox == interleaved output row (f*i + py).
    return out[:B].reshape(N, C, f * H, out_w)


def _reference_forward(x, kernel_1d=(1, 3, 3, 1), factor=2):
    """Independent JAX reference via lax.conv_general_dilated (lhs dilation)."""
    k = np.asarray(kernel_1d, dtype=np.float32)
    k2 = np.outer(k, k) if k.ndim == 1 else k
    k2 = k2 / k2.sum() * (factor ** 2)
    kh, kw = k2.shape
    p = kh - factor
    pad0 = (p + 1) // 2 + factor - 1
    pad1 = p // 2
    N, C, H, W = x.shape
    kf = jnp.asarray(np.ascontiguousarray(k2[::-1, ::-1])).reshape(1, 1, kh, kw)
    xb = x.reshape(N * C, 1, H, W)
    # lhs_dilation gives size H*factor-(factor-1); upfirdn keeps trailing zeros,
    # so fold the extra (factor-1) zeros into the trailing pad.
    out = jax.lax.conv_general_dilated(
        xb.astype(jnp.float32), kf,
        window_strides=(1, 1),
        padding=((pad0, pad1 + factor - 1), (pad0, pad1 + factor - 1)),
        lhs_dilation=(factor, factor),
        dimension_numbers=("NCHW", "OIHW", "NCHW"),
        precision=jax.lax.Precision.HIGHEST,
    )
    return out.reshape(N, C, out.shape[-2], out.shape[-1]).astype(x.dtype)


if __name__ == "__main__":
    key = jax.random.PRNGKey(0)
    k_main, k_aux = jax.random.split(key)

    # primary shape (matches the module's typical NCHW usage)
    N, C, H, W = 2, 4, 16, 16
    x = jax.random.normal(k_main, (N, C, H, W), dtype=jnp.float32)
    out = upsample_kernel_forward(x, kernel_1d=(1, 3, 3, 1), factor=2)
    out = jax.block_until_ready(out)
    assert out.shape == (N, C, 2 * H, 2 * W), out.shape
    ref = _reference_forward(x, kernel_1d=(1, 3, 3, 1), factor=2)
    np.testing.assert_allclose(np.asarray(out), np.asarray(ref), rtol=1e-5, atol=1e-5)

    # second shape: exercises TB > 1 per grid step and batch padding (B % TB != 0)
    N2, C2, H2, W2 = 1, 33, 8, 8
    x2 = jax.random.normal(k_aux, (N2, C2, H2, W2), dtype=jnp.float32)
    out2 = jax.block_until_ready(upsample_kernel_forward(x2))
    ref2 = _reference_forward(x2)
    np.testing.assert_allclose(np.asarray(out2), np.asarray(ref2), rtol=1e-5, atol=1e-5)

    print("KERNEL_OK")
</pallas_src>

<mosaic_0001>
module attributes {stable_mosaic.version = 11 : i64} {
  func.func @_upfir_rowpoly_kernel(%arg0: i32, %arg1: memref<1x18x35xf32, #tpu.memory_space<vmem>>, %arg2: memref<1x16x2x32xf32, #tpu.memory_space<vmem>>) attributes {dimension_semantics = [#tpu.dimension_semantics<parallel>], iteration_bounds = array<i64: 8>, scalar_prefetch = 0 : i64, scratch_operands = 0 : i64, tpu.core_type = #tpu.core_type<tc>, window_params = [{transform_indices = @transform_0, window_bounds = array<i64: 1, 18, 35>}, {transform_indices = @transform_1, window_bounds = array<i64: 1, 16, 2, 32>}]} {
    %c0 = arith.constant 0 : index
    %c0_0 = arith.constant 0 : index
    %c0_1 = arith.constant 0 : index
    %0 = vector.load %arg1[%c0, %c0_0, %c0_1] : memref<1x18x35xf32, #tpu.memory_space<vmem>>, vector<1x18x35xf32>
    %1 = vector.shape_cast %0 : vector<1x18x35xf32> to vector<18x35xf32>
    %2 = vector.extract_strided_slice %1 {offsets = [0, 0], sizes = [16, 35], strides = [1, 1]} : vector<18x35xf32> to vector<16x35xf32>
    %cst = arith.constant 2.500000e-01 : f32
    %3 = vector.broadcast %cst : f32 to vector<16x35xf32>
    %4 = arith.mulf %3, %2 : vector<16x35xf32>
    %5 = vector.extract_strided_slice %1 {offsets = [1, 0], sizes = [16, 35], strides = [1, 1]} : vector<18x35xf32> to vector<16x35xf32>
    %cst_2 = arith.constant 7.500000e-01 : f32
    %6 = vector.broadcast %cst_2 : f32 to vector<16x35xf32>
    %7 = arith.mulf %6, %5 : vector<16x35xf32>
    %8 = arith.addf %4, %7 : vector<16x35xf32>
    %9 = vector.extract_strided_slice %8 {offsets = [0, 0], sizes = [16, 32], strides = [1, 1]} : vector<16x35xf32> to vector<16x32xf32>
    %cst_3 = arith.constant 2.500000e-01 : f32
    %10 = vector.broadcast %cst_3 : f32 to vector<16x32xf32>
    %11 = arith.mulf %10, %9 : vector<16x32xf32>
    %12 = vector.extract_strided_slice %8 {offsets = [0, 1], sizes = [16, 32], strides = [1, 1]} : vector<16x35xf32> to vector<16x32xf32>
    %cst_4 = arith.constant 7.500000e-01 : f32
    %13 = vector.broadcast %cst_4 : f32 to vector<16x32xf32>
    %14 = arith.mulf %13, %12 : vector<16x32xf32>
    %15 = arith.addf %11, %14 : vector<16x32xf32>
    %16 = vector.extract_strided_slice %8 {offsets = [0, 2], sizes = [16, 32], strides = [1, 1]} : vector<16x35xf32> to vector<16x32xf32>
    %cst_5 = arith.constant 7.500000e-01 : f32
    %17 = vector.broadcast %cst_5 : f32 to vector<16x32xf32>
    %18 = arith.mulf %17, %16 : vector<16x32xf32>
    %19 = arith.addf %15, %18 : vector<16x32xf32>
    %20 = vector.extract_strided_slice %8 {offsets = [0, 3], sizes = [16, 32], strides = [1, 1]} : vector<16x35xf32> to vector<16x32xf32>
    %cst_6 = arith.constant 2.500000e-01 : f32
    %21 = vector.broadcast %cst_6 : f32 to vector<16x32xf32>
    %22 = arith.mulf %21, %20 : vector<16x32xf32>
    %23 = arith.addf %19, %22 : vector<16x32xf32>
    %c0_7 = arith.constant 0 : index
    %c0_8 = arith.constant 0 : index
    %c0_9 = arith.constant 0 : index
    %c0_10 = arith.constant 0 : index
    %24 = vector.load %arg2[%c0_7, %c0_8, %c0_9, %c0_10] : memref<1x16x2x32xf32, #tpu.memory_space<vmem>>, vector<1x16x1x32xf32>
    %25 = vector.shape_cast %24 : vector<1x16x1x32xf32> to vector<16x32xf32>
    %26 = vector.shape_cast %23 : vector<16x32xf32> to vector<1x16x1x32xf32>
    tpu.vector_store %arg2[%c0_7, %c0_8, %c0_9, %c0_10], %26 {strides = array<i32>} : memref<1x16x2x32xf32, #tpu.memory_space<vmem>>, vector<1x16x1x32xf32>,
    %27 = vector.extract_strided_slice %1 {offsets = [1, 0], sizes = [16, 35], strides = [1, 1]} : vector<18x35xf32> to vector<16x35xf32>
    %cst_11 = arith.constant 7.500000e-01 : f32
    %28 = vector.broadcast %cst_11 : f32 to vector<16x35xf32>
    %29 = arith.mulf %28, %27 : vector<16x35xf32>
    %30 = vector.extract_strided_slice %1 {offsets = [2, 0], sizes = [16, 35], strides = [1, 1]} : vector<18x35xf32> to vector<16x35xf32>
    %cst_12 = arith.constant 2.500000e-01 : f32
    %31 = vector.broadcast %cst_12 : f32 to vector<16x35xf32>
    %32 = arith.mulf %31, %30 : vector<16x35xf32>
    %33 = arith.addf %29, %32 : vector<16x35xf32>
    %34 = vector.extract_strided_slice %33 {offsets = [0, 0], sizes = [16, 32], strides = [1, 1]} : vector<16x35xf32> to vector<16x32xf32>
    %cst_13 = arith.constant 2.500000e-01 : f32
    %35 = vector.broadcast %cst_13 : f32 to vector<16x32xf32>
    %36 = arith.mulf %35, %34 : vector<16x32xf32>
    %37 = vector.extract_strided_slice %33 {offsets = [0, 1], sizes = [16, 32], strides = [1, 1]} : vector<16x35xf32> to vector<16x32xf32>
    %cst_14 = arith.constant 7.500000e-01 : f32
    %38 = vector.broadcast %cst_14 : f32 to vector<16x32xf32>
    %39 = arith.mulf %38, %37 : vector<16x32xf32>
    %40 = arith.addf %36, %39 : vector<16x32xf32>
    %41 = vector.extract_strided_slice %33 {offsets = [0, 2], sizes = [16, 32], strides = [1, 1]} : vector<16x35xf32> to vector<16x32xf32>
    %cst_15 = arith.constant 7.500000e-01 : f32
    %42 = vector.broadcast %cst_15 : f32 to vector<16x32xf32>
    %43 = arith.mulf %42, %41 : vector<16x32xf32>
    %44 = arith.addf %40, %43 : vector<16x32xf32>
    %45 = vector.extract_strided_slice %33 {offsets = [0, 3], sizes = [16, 32], strides = [1, 1]} : vector<16x35xf32> to vector<16x32xf32>
    %cst_16 = arith.constant 2.500000e-01 : f32
    %46 = vector.broadcast %cst_16 : f32 to vector<16x32xf32>
    %47 = arith.mulf %46, %45 : vector<16x32xf32>
    %48 = arith.addf %44, %47 : vector<16x32xf32>
    %c0_17 = arith.constant 0 : index
    %c0_18 = arith.constant 0 : index
    %c1 = arith.constant 1 : index
    %c0_19 = arith.constant 0 : index
    %49 = vector.load %arg2[%c0_17, %c0_18, %c1, %c0_19] : memref<1x16x2x32xf32, #tpu.memory_space<vmem>>, vector<1x16x1x32xf32>
    %50 = vector.shape_cast %49 : vector<1x16x1x32xf32> to vector<16x32xf32>
    %51 = vector.shape_cast %48 : vector<16x32xf32> to vector<1x16x1x32xf32>
    tpu.vector_store %arg2[%c0_17, %c0_18, %c1, %c0_19], %51 {strides = array<i32>} : memref<1x16x2x32xf32, #tpu.memory_space<vmem>>, vector<1x16x1x32xf32>,
    return
  }
  func.func @transform_0(%arg0: i32) -> (i32, i32, i32) {
    %c0_i32 = arith.constant 0 : i32
    %c0_i32_0 = arith.constant 0 : i32
    %c0_i32_1 = arith.constant 0 : i32
    return %arg0, %c0_i32, %c0_i32_0 : i32, i32, i32
  }
  func.func @transform_1(%arg0: i32) -> (i32, i32, i32, i32) {
    %c0_i32 = arith.constant 0 : i32
    %c0_i32_0 = arith.constant 0 : i32
    %c0_i32_1 = arith.constant 0 : i32
    %c0_i32_2 = arith.constant 0 : i32
    return %arg0, %c0_i32, %c0_i32_0, %c0_i32_1 : i32, i32, i32, i32
  }
}

</mosaic_0001>

<llo_original>
// kernel: tpu_custom_call.1
$region0: #{tpu_custom_call.1}
  #allocation0 [shape = 'u32[]', space=smem, size = 0x4, offset = 0x4, fixed_abs, tag = 'smem constant byte address 0x4 - core index']
  #allocation1 [shape = 'u32[144,128]{1,0:T(1,128)}', space=vmem, size = 0x12000, scoped, tag = 'internal scratch']
  %s0 = inlined_call_operand.vmem [shape: f32[8,18,35], index: 0, kind: input, shape index: {}]
  %s1 = inlined_call_operand.hbm [shape: f32[8,16,2,32], index: 1, kind: output, shape index: {}]
  %s2 = sld [smem:[#allocation0]]
  $region37: #{tpu_custom_call.1} parent=0
    _
  %s4 = ssub.s32 1, %s2
  %s5 = scalar_select 0, %s4, %s2
  $region1: #{tpu_custom_call.1} parent=0
    #allocation2 [shape = 'u8[32768]{0}', space=vmem, size = 0x8000, scoped, tag = 'output window, operand 0']
    #allocation3 [shape = 's32[2]{0}', space=sflag, size = 0x8, scoped, tag = 'scoped memory for tpu_custom_call.1']
    %6 = vsyncpa [#allocation3], 0
    %s7 = scalar_lea.sflag [#allocation3], 1
    %8 = vsyncpa %s7, 0
    loop: start=0, step=1, limit=10
    $region2: #{tpu_custom_call.1} parent=1 // loop_pre_header
      _
    $region3: #{tpu_custom_call.1} parent=1 // loop_header
      %s10 = sphi 0, %s14
      %p11 = scmp.ge.s32.totalorder %s10, 10
      %s20 = sphi 0, %s22
      %s23 = sphi 0, %s20
      %s24 = sphi 0, %s23
      %s40 = sphi 0, %s24
      %s46 = sphi 0, %s48
      %s49 = sphi 0, %s46
      %s50 = sphi 0, %s49
      %s66 = sphi 0, %s50
    $region4: #{tpu_custom_call.1} parent=1 // loop_header_branch
      %13 = sbr.rel (%p11) target = $region8
    $region5: #{tpu_custom_call.1} parent=1 // loop_body
      %s15 = ssub.s32 %s10, 1
      %s16 = ssub.s32 %s10, 2
      %s17 = sadd.s32 %s10, 1
      %s18 = ssub.s32 %s10, %s17
      %p19 = scmp.eq.s32.totalorder %s18, 0
      %s21 = sadd.s32 %s20, 1
      %s22 = scalar_select %p19, %s20, %s21
      %p25 = pneg %p19
      %p26 = scmp.eq.s32.totalorder %s10, 7
      %p27 = por %p25, %p26
      %p28 = scmp.ne.s32.totalorder %s20, %s23
      %p29 = scmp.eq.s32.totalorder %s10, 0
      %p30 = por %p28, %p29
      %p31 = scmp.ne.s32.totalorder %s20, %s23
      %p32 = scmp.eq.s32.totalorder %s15, 7
      %p33 = por %p31, %p32
      %p34 = scmp.ne.s32.totalorder %s23, %s24
      %p35 = scmp.eq.s32.totalorder %s15, 0
      %p36 = por %p34, %p35
      %p37 = scmp.ne.s32.totalorder %s23, %s24
      %p38 = scmp.eq.s32.totalorder %s16, 7
      %p39 = por %p37, %p38
      %p41 = scmp.ne.s32.totalorder %s24, %s40
      %p42 = scmp.eq.s32.totalorder %s16, 0
      %p43 = por %p41, %p42
      %s44 = ssub.s32 %s10, %s17
      %p45 = scmp.eq.s32.totalorder %s44, 0
      %s47 = sadd.s32 %s46, 1
      %s48 = scalar_select %p45, %s46, %s47
      %p51 = pneg %p45
      %p52 = scmp.eq.s32.totalorder %s10, 7
      %p53 = por %p51, %p52
      %p54 = scmp.ne.s32.totalorder %s46, %s49
      %p55 = scmp.eq.s32.totalorder %s10, 0
      %p56 = por %p54, %p55
      %p57 = scmp.ne.s32.totalorder %s46, %s49
      %p58 = scmp.eq.s32.totalorder %s15, 7
      %p59 = por %p57, %p58
      %p60 = scmp.ne.s32.totalorder %s49, %s50
      %p61 = scmp.eq.s32.totalorder %s15, 0
      %p62 = por %p60, %p61
      %p63 = scmp.ne.s32.totalorder %s49, %s50
      %p64 = scmp.eq.s32.totalorder %s16, 7
      %p65 = por %p63, %p64
      %p67 = scmp.ne.s32.totalorder %s50, %s66
      %p68 = scmp.eq.s32.totalorder %s16, 0
      %p69 = por %p67, %p68
      %p70 = scmp.le.s32.totalorder 1, %s10
      %p71 = scmp.lt.s32.totalorder %s10, 9
      %p72 = pnand %p70, %p71
      %p73 = pneg %p72
      // Predicated region
      $region9: #{tpu_custom_call.1} parent=5 // pred_check
        _
      $region10: #{tpu_custom_call.1} parent=5 // pred_check_branch
        %75 = sbr.rel (%p72) target = $region12
      $region11: #{tpu_custom_call.1} parent=5 // pred_region
        %s76 = ssub.s32 %s10, 1
      $region12: #{tpu_custom_call.1} parent=5 // pred_fallthru
        _
      %p77 = scmp.lt.s32.totalorder %s10, 8
      // Predicated region
      $region13: #{tpu_custom_call.1} parent=5 // pred_check
        %p78 = pneg %p77
      $region14: #{tpu_custom_call.1} parent=5 // pred_check_branch
        %80 = sbr.rel (%p78) target = $region16
      $region15: #{tpu_custom_call.1} parent=5 // pred_region
        // Predicated region
        $region17: #{tpu_custom_call.1} parent=15 // pred_check
          %p81 = pneg %p30
        $region18: #{tpu_custom_call.1} parent=15 // pred_check_branch
          %83 = sbr.rel (%p81) target = $region20
        $region19: #{tpu_custom_call.1} parent=15 // pred_region
          %p84 = scmp.lt.s32.totalorder %s10, 7
          %s85 = scalar_select %p84, %s10, 7
          %s86 = smul.addr %s85, 3
          %s87 = smul.addr %s86, 8
          %s88 = scalar_lea.vmem %s0, %s87
        $region20: #{tpu_custom_call.1} parent=15 // pred_fallthru
          _
      $region16: #{tpu_custom_call.1} parent=5 // pred_fallthru
        _
      %p89 = scmp.le.s32.totalorder 1, %s10
      %p90 = scmp.lt.s32.totalorder %s10, 9
      %p91 = pnand %p89, %p90
      %p92 = pneg %p91
      // Predicated region
      $region21: #{tpu_custom_call.1} parent=5 // pred_check
        _
      $region22: #{tpu_custom_call.1} parent=5 // pred_check_branch
        %94 = sbr.rel (%p91) target = $region24
      $region23: #{tpu_custom_call.1} parent=5 // pred_region
        %s95 = ssub.s32 %s10, 1
        %p96 = scmp.lt.s32.totalorder %s15, 7
        %s97 = scalar_select %p96, %s15, 7
        %s98 = smul.addr %s97, 3
        %s99 = smul.addr %s98, 8
        %s100 = scalar_lea.vmem %s0, %s99
        %p101 = pneg %p36
        %p102 = pneg %p33
        %p103 = pneg %p62
        %p104 = pneg %p59
        %s105 = sand.u32 %s49, 1
        %s106 = scalar_lea.sflag [#allocation3], %s105
        %s107 = sand.u32 %s49, 1
        %s108 = smul.addr %s107, 32
        %s109 = scalar_lea.vmem [#allocation2], %s108
        %p110 = scmp.lt.s32.totalorder %s15, 7
        %s111 = scalar_select %p110, %s15, 7
        %s112 = smul.addr %s111, 3
        %s113 = smul.addr %s112, 8
        %s114 = scalar_lea.vmem %s0, %s113
        %v115 = vld [vmem:[%s114] sm:$0xff]
        %v116 = vld [vmem:[%s114 + $0x8] sm:$0xff]
        %v117 = vld [vmem:[%s114 + $0x10] sm:$0x3]
        %v118 = vmul.f32 %v115, 0.25
        %v119 = vmul.f32 %v116, 0.25
        %v120 = vmul.f32 %v115, 0.75
        %v121 = vmul.f32 %v116, 0.75
        %v122 = vmul.f32 %v117, 0.75
        %vm126 = vcmask 1046528
        %v127 = vrot.slane %v120, 1
        %v128 = vrot.slane %v121, 1
        %v129 = vsel %vm126, %v127, %v128
        %v130 = vrot.slane %v122, 1
        %v131 = vsel %vm126, %v128, %v130
        %v134 = vadd.f32 %v118, %v129
        %v135 = vadd.f32 %v119, %v131
        %v136 = vmul.f32 %v134, 0.25
        %v137 = vmul.f32 %v135, 0.25
        %v138 = vmul.f32 %v134, 0.75
        %v139 = vmul.f32 %v135, 0.75
        %142 = vrot.lane.b32.xlu0 %v138, 127
        %v143 = vpop.permute.xlu0 %142
        %144 = vrot.lane.b32.xlu0 %v139, 127
        %v145 = vpop.permute.xlu0 %144
        %v148 = vadd.f32 %v136, %v143
        %v149 = vadd.f32 %v137, %v145
        %150 = vrot.lane.b32.xlu0 %v138, 126
        %v151 = vpop.permute.xlu0 %150
        %152 = vrot.lane.b32.xlu0 %v139, 126
        %v153 = vpop.permute.xlu0 %152
        %v156 = vadd.f32 %v148, %v151
        %v157 = vadd.f32 %v149, %v153
        %160 = vrot.lane.b32.xlu0 %v136, 125
        %v161 = vpop.permute.xlu0 %160
        %162 = vrot.lane.b32.xlu0 %v137, 125
        %v163 = vpop.permute.xlu0 %162
        %v166 = vadd.f32 %v156, %v161
        %v167 = vadd.f32 %v157, %v163
        %v170 = vcombine.high %v166, %v166
        %v172 = vunpack.c.l.s4 1966171168
        %v173 = vunpack.c.0.s8 %v172
        %v174 = vlaneseq
        %v175 = vshrl.u32 %v174, 7
        %v176 = vsub.s32 %v173, %v175
        %v177 = vrot.slane %v166, %v176
        %v179 = vunpack.c.l.s4 1966171168
        %v180 = vunpack.c.0.s8 %v179
        %v181 = vlaneseq
        %v182 = vshrl.u32 %v181, 7
        %v183 = vsub.s32 %v180, %v182
        %v184 = vrot.slane %v170, %v183
        %v185 = vcombine.high %v177, %v177
        %v186 = vcombine.high %v184, %v184
        %v188 = vunpack.c.l.s4 1966171168
        %v189 = vunpack.c.0.s8 %v188
        %v190 = vlaneseq
        %v191 = vshrl.u32 %v190, 7
        %v192 = vsub.s32 %v189, %v191
        %v193 = vrot.slane %v177, %v192
        %v195 = vunpack.c.l.s4 1966171168
        %v196 = vunpack.c.0.s8 %v195
        %v197 = vlaneseq
        %v198 = vshrl.u32 %v197, 7
        %v199 = vsub.s32 %v196, %v198
        %v200 = vrot.slane %v184, %v199
        %v202 = vunpack.c.l.s4 1966171168
        %v203 = vunpack.c.0.s8 %v202
        %v204 = vlaneseq
        %v205 = vshrl.u32 %v204, 7
        %v206 = vsub.s32 %v203, %v205
        %v207 = vrot.slane %v185, %v206
        %v209 = vunpack.c.l.s4 1966171168
        %v210 = vunpack.c.0.s8 %v209
        %v211 = vlaneseq
        %v212 = vshrl.u32 %v211, 7
        %v213 = vsub.s32 %v210, %v212
        %v214 = vrot.slane %v186, %v213
        %v215 = vcombine.high %v193, %v193
        %v216 = vcombine.high %v200, %v200
        %v217 = vcombine.high %v207, %v207
        %v218 = vcombine.high %v214, %v214
        %v219 = vcombine.high %v167, %v167
        %v221 = vunpack.c.l.s4 1966171168
        %v222 = vunpack.c.0.s8 %v221
        %v223 = vlaneseq
        %v224 = vshrl.u32 %v223, 7
        %v225 = vsub.s32 %v222, %v224
        %v226 = vrot.slane %v167, %v225
        %v228 = vunpack.c.l.s4 1966171168
        %v229 = vunpack.c.0.s8 %v228
        %v230 = vlaneseq
        %v231 = vshrl.u32 %v230, 7
        %v232 = vsub.s32 %v229, %v231
        %v233 = vrot.slane %v219, %v232
        %v234 = vcombine.high %v226, %v226
        %v235 = vcombine.high %v233, %v233
        %v237 = vunpack.c.l.s4 1966171168
        %v238 = vunpack.c.0.s8 %v237
        %v239 = vlaneseq
        %v240 = vshrl.u32 %v239, 7
        %v241 = vsub.s32 %v238, %v240
        %v242 = vrot.slane %v226, %v241
        %v244 = vunpack.c.l.s4 1966171168
        %v245 = vunpack.c.0.s8 %v244
        %v246 = vlaneseq
        %v247 = vshrl.u32 %v246, 7
        %v248 = vsub.s32 %v245, %v247
        %v249 = vrot.slane %v233, %v248
        %v251 = vunpack.c.l.s4 1966171168
        %v252 = vunpack.c.0.s8 %v251
        %v253 = vlaneseq
        %v254 = vshrl.u32 %v253, 7
        %v255 = vsub.s32 %v252, %v254
        %v256 = vrot.slane %v234, %v255
        %v258 = vunpack.c.l.s4 1966171168
        %v259 = vunpack.c.0.s8 %v258
        %v260 = vlaneseq
        %v261 = vshrl.u32 %v260, 7
        %v262 = vsub.s32 %v259, %v261
        %v263 = vrot.slane %v235, %v262
        %v264 = vcombine.high %v242, %v242
        %v265 = vcombine.high %v249, %v249
        %v266 = vcombine.high %v256, %v256
        %v267 = vcombine.high %v263, %v263
        %vm284 = vcmask 253952
        %285 = vst.msk [vmem:[%s109] sm:$0x1] %vm284, %v193
        %286 = vst.msk [vmem:[%s109 + $0x2] sm:$0x1] %vm284, %v207
        %287 = vst.msk [vmem:[%s109 + $0x4] sm:$0x1] %vm284, %v215
        %288 = vst.msk [vmem:[%s109 + $0x6] sm:$0x1] %vm284, %v217
        %289 = vst.msk [vmem:[%s109 + $0x8] sm:$0x1] %vm284, %v200
        %290 = vst.msk [vmem:[%s109 + $0xa] sm:$0x1] %vm284, %v214
        %291 = vst.msk [vmem:[%s109 + $0xc] sm:$0x1] %vm284, %v216
        %292 = vst.msk [vmem:[%s109 + $0xe] sm:$0x1] %vm284, %v218
        %293 = vst.msk [vmem:[%s109 + $0x10] sm:$0x1] %vm284, %v242
        %294 = vst.msk [vmem:[%s109 + $0x12] sm:$0x1] %vm284, %v256
        %295 = vst.msk [vmem:[%s109 + $0x14] sm:$0x1] %vm284, %v264
        %296 = vst.msk [vmem:[%s109 + $0x16] sm:$0x1] %vm284, %v266
        %297 = vst.msk [vmem:[%s109 + $0x18] sm:$0x1] %vm284, %v249
        %298 = vst.msk [vmem:[%s109 + $0x1a] sm:$0x1] %vm284, %v263
        %299 = vst.msk [vmem:[%s109 + $0x1c] sm:$0x1] %vm284, %v265
        %300 = vst.msk [vmem:[%s109 + $0x1e] sm:$0x1] %vm284, %v267
        %v301 = vmul.f32 %v117, 0.25
        %v305 = vrot.slane %v118, 1
        %v306 = vrot.slane %v119, 1
        %v307 = vsel %vm126, %v305, %v306
        %v308 = vrot.slane %v301, 1
        %v309 = vsel %vm126, %v306, %v308
        %v313 = vadd.f32 %v120, %v307
        %v314 = vadd.f32 %v121, %v309
        %v315 = vadd.f32 %v122, %v308
        %v316 = vmul.f32 %v313, 0.25
        %v317 = vmul.f32 %v314, 0.25
        %v318 = vmul.f32 %v315, 0.25
        %v319 = vmul.f32 %v313, 0.75
        %v320 = vmul.f32 %v314, 0.75
        %v321 = vmul.f32 %v315, 0.75
        %325 = vrot.lane.b32.xlu0 %v319, 127
        %v326 = vpop.permute.xlu0 %325
        %327 = vrot.lane.b32.xlu0 %v320, 127
        %v328 = vpop.permute.xlu0 %327
        %329 = vrot.lane.b32.xlu0 %v321, 127
        %v330 = vpop.permute.xlu0 %329
        %v334 = vadd.f32 %v316, %v326
        %v335 = vadd.f32 %v317, %v328
        %v336 = vadd.f32 %v318, %v330
        %337 = vrot.lane.b32.xlu0 %v319, 126
        %v338 = vpop.permute.xlu0 %337
        %339 = vrot.lane.b32.xlu0 %v320, 126
        %v340 = vpop.permute.xlu0 %339
        %341 = vrot.lane.b32.xlu0 %v321, 126
        %v342 = vpop.permute.xlu0 %341
        %v346 = vadd.f32 %v334, %v338
        %v347 = vadd.f32 %v335, %v340
        %v348 = vadd.f32 %v336, %v342
        %352 = vrot.lane.b32.xlu0 %v316, 125
        %v353 = vpop.permute.xlu0 %352
        %354 = vrot.lane.b32.xlu0 %v317, 125
        %v355 = vpop.permute.xlu0 %354
        %356 = vrot.lane.b32.xlu0 %v318, 125
        %v357 = vpop.permute.xlu0 %356
        %v361 = vadd.f32 %v346, %v353
        %v362 = vadd.f32 %v347, %v355
        %v363 = vadd.f32 %v348, %v357
        %v367 = vcombine.high %v361, %v361
        %v369 = vunpack.c.l.s4 1966171168
        %v370 = vunpack.c.0.s8 %v369
        %v371 = vlaneseq
        %v372 = vshrl.u32 %v371, 7
        %v373 = vsub.s32 %v370, %v372
        %v374 = vrot.slane %v361, %v373
        %v376 = vunpack.c.l.s4 1966171168
        %v377 = vunpack.c.0.s8 %v376
        %v378 = vlaneseq
        %v379 = vshrl.u32 %v378, 7
        %v380 = vsub.s32 %v377, %v379
        %v381 = vrot.slane %v367, %v380
        %v382 = vcombine.high %v374, %v374
        %v383 = vcombine.high %v381, %v381
        %v385 = vunpack.c.l.s4 1966171168
        %v386 = vunpack.c.0.s8 %v385
        %v387 = vlaneseq
        %v388 = vshrl.u32 %v387, 7
        %v389 = vsub.s32 %v386, %v388
        %v390 = vrot.slane %v374, %v389
        %v392 = vunpack.c.l.s4 1966171168
        %v393 = vunpack.c.0.s8 %v392
        %v394 = vlaneseq
        %v395 = vshrl.u32 %v394, 7
        %v396 = vsub.s32 %v393, %v395
        %v397 = vrot.slane %v381, %v396
        %v399 = vunpack.c.l.s4 1966171168
        %v400 = vunpack.c.0.s8 %v399
        %v401 = vlaneseq
        %v402 = vshrl.u32 %v401, 7
        %v403 = vsub.s32 %v400, %v402
        %v404 = vrot.slane %v382, %v403
        %v406 = vunpack.c.l.s4 1966171168
        %v407 = vunpack.c.0.s8 %v406
        %v408 = vlaneseq
        %v409 = vshrl.u32 %v408, 7
        %v410 = vsub.s32 %v407, %v409
        %v411 = vrot.slane %v383, %v410
        %v412 = vcombine.high %v390, %v390
        %v413 = vcombine.high %v397, %v397
        %v414 = vcombine.high %v404, %v404
        %v415 = vcombine.high %v411, %v411
        %v416 = vcombine.high %v362, %v362
        %v418 = vunpack.c.l.s4 1966171168
        %v419 = vunpack.c.0.s8 %v418
        %v420 = vlaneseq
        %v421 = vshrl.u32 %v420, 7
        %v422 = vsub.s32 %v419, %v421
        %v423 = vrot.slane %v362, %v422
        %v425 = vunpack.c.l.s4 1966171168
        %v426 = vunpack.c.0.s8 %v425
        %v427 = vlaneseq
        %v428 = vshrl.u32 %v427, 7
        %v429 = vsub.s32 %v426, %v428
        %v430 = vrot.slane %v416, %v429
        %v431 = vcombine.high %v423, %v423
        %v432 = vcombine.high %v430, %v430
        %v434 = vunpack.c.l.s4 1966171168
        %v435 = vunpack.c.0.s8 %v434
        %v436 = vlaneseq
        %v437 = vshrl.u32 %v436, 7
        %v438 = vsub.s32 %v435, %v437
        %v439 = vrot.slane %v423, %v438
        %v441 = vunpack.c.l.s4 1966171168
        %v442 = vunpack.c.0.s8 %v441
        %v443 = vlaneseq
        %v444 = vshrl.u32 %v443, 7
        %v445 = vsub.s32 %v442, %v444
        %v446 = vrot.slane %v430, %v445
        %v448 = vunpack.c.l.s4 1966171168
        %v449 = vunpack.c.0.s8 %v448
        %v450 = vlaneseq
        %v451 = vshrl.u32 %v450, 7
        %v452 = vsub.s32 %v449, %v451
        %v453 = vrot.slane %v431, %v452
        %v455 = vunpack.c.l.s4 1966171168
        %v456 = vunpack.c.0.s8 %v455
        %v457 = vlaneseq
        %v458 = vshrl.u32 %v457, 7
        %v459 = vsub.s32 %v456, %v458
        %v460 = vrot.slane %v432, %v459
        %v461 = vcombine.high %v439, %v439
        %v462 = vcombine.high %v446, %v446
        %v463 = vcombine.high %v453, %v453
        %v464 = vcombine.high %v460, %v460
        %v466 = vunpack.c.l.s4 1966171168
        %v467 = vunpack.c.0.s8 %v466
        %v468 = vlaneseq
        %v469 = vshrl.u32 %v468, 7
        %v470 = vsub.s32 %v467, %v469
        %v471 = vrot.slane %v363, %v470
        %v473 = vunpack.c.l.s4 1966171168
        %v474 = vunpack.c.0.s8 %v473
        %v475 = vlaneseq
        %v476 = vshrl.u32 %v475, 7
        %v477 = vsub.s32 %v474, %v476
        %v478 = vrot.slane %v471, %v477
        %495 = vst.msk [vmem:[%s109 + $0x1] sm:$0x1] %vm284, %v404
        %496 = vst.msk [vmem:[%s109 + $0x3] sm:$0x1] %vm284, %v412
        %497 = vst.msk [vmem:[%s109 + $0x5] sm:$0x1] %vm284, %v414
        %498 = vst.msk [vmem:[%s109 + $0x7] sm:$0x1] %vm284, %v397
        %499 = vst.msk [vmem:[%s109 + $0x9] sm:$0x1] %vm284, %v411
        %500 = vst.msk [vmem:[%s109 + $0xb] sm:$0x1] %vm284, %v413
        %501 = vst.msk [vmem:[%s109 + $0xd] sm:$0x1] %vm284, %v415
        %502 = vst.msk [vmem:[%s109 + $0xf] sm:$0x1] %vm284, %v439
        %503 = vst.msk [vmem:[%s109 + $0x11] sm:$0x1] %vm284, %v453
        %504 = vst.msk [vmem:[%s109 + $0x13] sm:$0x1] %vm284, %v461
        %505 = vst.msk [vmem:[%s109 + $0x15] sm:$0x1] %vm284, %v463
        %506 = vst.msk [vmem:[%s109 + $0x17] sm:$0x1] %vm284, %v446
        %507 = vst.msk [vmem:[%s109 + $0x19] sm:$0x1] %vm284, %v460
        %508 = vst.msk [vmem:[%s109 + $0x1b] sm:$0x1] %vm284, %v462
        %509 = vst.msk [vmem:[%s109 + $0x1d] sm:$0x1] %vm284, %v464
        %510 = vst.msk [vmem:[%s109 + $0x1f] sm:$0x1] %vm284, %v478
        %s511 = sand.u32 %s49, 1
        %s512 = scalar_lea.sflag [#allocation3], %s511
        %s513 = sand.u32 %s49, 1
        %s514 = smul.addr %s513, 32
        %s515 = scalar_lea.vmem [#allocation2], %s514
        // Predicated region
        $region25: #{tpu_custom_call.1} parent=23 // pred_check
          %p516 = pneg %p59
        $region26: #{tpu_custom_call.1} parent=23 // pred_check_branch
          %518 = sbr.rel (%p516) target = $region28
        $region27: #{tpu_custom_call.1} parent=23 // pred_region
          %s520 = ssub.s32 512, 512
          %521 = vsyncadd %s512, %s520
          %s522 = smul.addr %s15, 16
          %s523 = smul.addr %s522, 32
          %s524 = scalar_lea.hbm %s1, %s523
          %s525 = sshll.u32 %s515, 4
          %s526 = int_to_ptr.vmem [resolvable:$true] %s525
          %531 = dma.vmem_to_hbm [thread:$0]  %s526, 512, %s524, %s512, 32, 32, 2
        $region28: #{tpu_custom_call.1} parent=23 // pred_fallthru
          _
      $region24: #{tpu_custom_call.1} parent=5 // pred_fallthru
        _
      %p532 = scmp.le.s32.totalorder 2, %s10
      // Predicated region
      $region29: #{tpu_custom_call.1} parent=5 // pred_check
        %p533 = pneg %p532
      $region30: #{tpu_custom_call.1} parent=5 // pred_check_branch
        %535 = sbr.rel (%p533) target = $region32
      $region31: #{tpu_custom_call.1} parent=5 // pred_region
        %s536 = ssub.s32 %s10, 2
        // Predicated region
        $region33: #{tpu_custom_call.1} parent=31 // pred_check
          %p537 = pneg %p65
        $region34: #{tpu_custom_call.1} parent=31 // pred_check_branch
          %539 = sbr.rel (%p537) target = $region36
        $region35: #{tpu_custom_call.1} parent=31 // pred_region
          %s540 = sand.u32 %s50, 1
          %s541 = scalar_lea.sflag [#allocation3], %s540
          %s542 = sand.u32 %s50, 1
          %s543 = smul.addr %s542, 32
          %s544 = scalar_lea.vmem [#allocation2], %s543
          %545 = dma.done %s541, 512
        $region36: #{tpu_custom_call.1} parent=31 // pred_fallthru
          _
      $region32: #{tpu_custom_call.1} parent=5 // pred_fallthru
        _
    $region6: #{tpu_custom_call.1} parent=1 // loop_footer
      %s14 = sadd.s32 1, %s10
    $region7: #{tpu_custom_call.1} parent=1 // loop_footer_branch
      %9 = sbr.rel target = $region3
    $region8: #{tpu_custom_call.1} parent=1 // loop_exit
      _
    %546 = vsyncpa [#allocation3], 1
    %s547 = scalar_lea.sflag [#allocation3], 1
    %548 = vsyncpa %s547, 1

</llo_original>
